<compile_context>
chip_gen: v7x
topology: tpu7x:2x2x1
jax: 0.10.0
libtpu: 0.0.40
codegen_flags: <defaults>
</compile_context>

<pallas_src>
import jax
import jax.numpy as jnp
from jax.experimental import pallas as pl
from jax.experimental.pallas import tpu as pltpu

HIDDEN = 256


def _critic_kernel(sa_ref,
                   w1_ref, b1_ref,
                   w2_ref, b2_ref,
                   w5_ref, b5_ref,
                   w3_ref, w6_ref, b36_ref,
                   out_ref):
    """Fused twin-Q forward for one batch tile; out_ref is (tile_b, 2)."""
    cdt = w1_ref.dtype                       # matmul compute dtype (bf16)

    sa = sa_ref[...].astype(cdt)             # (tb, sd+ad)

    # Fused layer 1 of both heads: one matmul -> (tb, 2*HIDDEN), f32 accumulate.
    z = jnp.dot(sa, w1_ref[...], preferred_element_type=jnp.float32) + b1_ref[...]
    z = jnp.maximum(z, 0.0).astype(cdt)      # ReLU in f32, cast once for layer 2/5

    h1 = z[:, :HIDDEN]                       # Q1 path (256-aligned slice)
    g1 = z[:, HIDDEN:]                       # Q2 path

    h2 = jnp.dot(h1, w2_ref[...], preferred_element_type=jnp.float32) + b2_ref[...]
    h2 = jnp.maximum(h2, 0.0).astype(cdt)

    g2 = jnp.dot(g1, w5_ref[...], preferred_element_type=jnp.float32) + b5_ref[...]
    g2 = jnp.maximum(g2, 0.0).astype(cdt)

    # Output projection with NO in-kernel concat: w3p has column 1 zeroed and
    # w6p has column 0 zeroed, so the sum of the two dots is [q1 | q2] and is
    # written with a single lane-contiguous (tb, 2) store.
    out_ref[...] = (jnp.dot(h2, w3_ref[...], preferred_element_type=jnp.float32)
                    + jnp.dot(g2, w6_ref[...], preferred_element_type=jnp.float32)
                    + b36_ref[...])


def critic_forward(state, action, packed_params, *, batch_block=1024, num_cores=1):
    """Returns (q1, q2), each (batch, 1) f32, matching Critic.forward.

    `num_cores=2` on v7x splits the parallel batch axis into >=2 tiles so both
    TensorCores get work (ignored when the batch is too small).
    """
    batch = state.shape[0]
    # The torch.cat([state, action], 1): a tiny batch*(sd+ad)*4 B XLA concat in
    # the wrapper so layer 1 is one matmul against one fused weight.
    sa = jnp.concatenate([state, action], axis=1)
    in_dim = sa.shape[1]

    tb = min(batch, batch_block)
    if num_cores > 1 and batch >= 8 * num_cores:
        per_core = ((pl.cdiv(batch, num_cores) + 7) // 8) * 8
        tb = min(tb, per_core)
    grid = (pl.cdiv(batch, tb),)

    def const_spec(arr):
        # Grid-constant weight/bias: index map is always (0, 0), so Pallas
        # keeps the tile resident across batch tiles (no per-tile re-DMA).
        return pl.BlockSpec(arr.shape, lambda i: (0, 0))

    flops = 2 * batch * (in_dim * 2 * HIDDEN      # fused layer 1 (both heads)
                         + 2 * HIDDEN * HIDDEN    # layers 2 & 5
                         + 2 * HIDDEN * 2)        # fused output projection
    bytes_accessed = int(sa.nbytes) + batch * 2 * 4 \
        + sum(int(p.nbytes) for p in packed_params)

    out = pl.pallas_call(
        _critic_kernel,
        out_shape=jax.ShapeDtypeStruct((batch, 2), jnp.float32),
        grid=grid,
        in_specs=[pl.BlockSpec((tb, in_dim), lambda i: (i, 0))]
                 + [const_spec(p) for p in packed_params],
        out_specs=pl.BlockSpec((tb, 2), lambda i: (i, 0)),
        compiler_params=pltpu.CompilerParams(
            dimension_semantics=("parallel",)),
        cost_estimate=pl.CostEstimate(
            flops=flops, transcendentals=0, bytes_accessed=bytes_accessed),
    )(sa, *packed_params)

    return out[:, 0:1], out[:, 1:2]


def init_critic_params(key, state_dim, action_dim):
    """Per-layer params mirroring nn.Linear default init.

    Weights stored as (in_features, out_features) f32; biases (1, out) f32.
    """
    dims = [
        (state_dim + action_dim, HIDDEN),   # l1
        (HIDDEN, HIDDEN),                   # l2
        (HIDDEN, 1),                        # l3
        (state_dim + action_dim, HIDDEN),   # l4
        (HIDDEN, HIDDEN),                   # l5
        (HIDDEN, 1),                        # l6
    ]
    params = []
    for fan_in, fan_out in dims:
        key, kw, kb = jax.random.split(key, 3)
        bound = float(fan_in) ** -0.5
        w = jax.random.uniform(kw, (fan_in, fan_out), jnp.float32, -bound, bound)
        b = jax.random.uniform(kb, (1, fan_out), jnp.float32, -bound, bound)
        params.append((w, b))
    return tuple(params)


def pack_critic_params(params, compute_dtype=jnp.bfloat16):
    """One-time repack of per-layer params into the fused kernel layout."""
    (w1, b1), (w2, b2), (w3, b3), (w4, b4), (w5, b5), (w6, b6) = params

    # Fused layer-1 weight for both heads: (sd+ad, 2*HIDDEN).
    w1f = jnp.concatenate([w1, w4], axis=1).astype(compute_dtype)
    b1f = jnp.concatenate([b1, b4], axis=1)                     # (1, 512) f32

    # Output projections padded to (HIDDEN, 2) with the other column zeroed,
    # so the kernel never needs a (tb, 2*HIDDEN) concat.
    w3p = jnp.concatenate([w3, jnp.zeros_like(w3)], axis=1).astype(compute_dtype)
    w6p = jnp.concatenate([jnp.zeros_like(w6), w6], axis=1).astype(compute_dtype)
    b36 = jnp.concatenate([b3, b6], axis=1)                     # (1, 2) f32

    return (w1f, b1f,
            w2.astype(compute_dtype), b2,
            w5.astype(compute_dtype), b5,
            w3p, w6p, b36)


def _reference_forward(state, action, params, compute_dtype=jnp.bfloat16):
    """Pure-JAX reference matching the kernel numerics (bf16 matmul inputs and
    bf16 inter-layer activations, f32 accumulate, f32 bias/ReLU)."""
    (w1, b1), (w2, b2), (w3, b3), (w4, b4), (w5, b5), (w6, b6) = params
    sa = jnp.concatenate([state, action], axis=1).astype(compute_dtype)

    def lin(x, w, b):
        return jnp.dot(x, w.astype(compute_dtype),
                       preferred_element_type=jnp.float32) + b

    h = jax.nn.relu(lin(sa, w1, b1)).astype(compute_dtype)
    h = jax.nn.relu(lin(h, w2, b2)).astype(compute_dtype)
    q1 = lin(h, w3, b3)
    g = jax.nn.relu(lin(sa, w4, b4)).astype(compute_dtype)
    g = jax.nn.relu(lin(g, w5, b5)).astype(compute_dtype)
    q2 = lin(g, w6, b6)
    return q1, q2


if __name__ == "__main__":
    state_dim, action_dim, batch = 17, 6, 8

    key = jax.random.PRNGKey(0)
    kp, ks, ka = jax.random.split(key, 3)

    params = init_critic_params(kp, state_dim, action_dim)
    packed = pack_critic_params(params)

    state = jax.random.normal(ks, (batch, state_dim), jnp.float32)
    action = jax.random.normal(ka, (batch, action_dim), jnp.float32)

    q1, q2 = critic_forward(state, action, packed)
    jax.block_until_ready((q1, q2))

    # Correctness check against a numerics-matched pure-JAX reference.
    r1, r2 = _reference_forward(state, action, params)
    assert q1.shape == (batch, 1) and q2.shape == (batch, 1)
    assert jnp.allclose(q1, r1, atol=1e-2, rtol=1e-2)
    assert jnp.allclose(q2, r2, atol=1e-2, rtol=1e-2)

    print("KERNEL_OK")
</pallas_src>

<mosaic_0001>
module attributes {stable_mosaic.version = 11 : i64} {
  func.func @_critic_kernel(%arg0: i32, %arg1: memref<8x23xf32, #tpu.memory_space<vmem>>, %arg2: memref<23x512xbf16, #tpu.memory_space<vmem>>, %arg3: memref<1x512xf32, #tpu.memory_space<vmem>>, %arg4: memref<256x256xbf16, #tpu.memory_space<vmem>>, %arg5: memref<1x256xf32, #tpu.memory_space<vmem>>, %arg6: memref<256x256xbf16, #tpu.memory_space<vmem>>, %arg7: memref<1x256xf32, #tpu.memory_space<vmem>>, %arg8: memref<256x2xbf16, #tpu.memory_space<vmem>>, %arg9: memref<256x2xbf16, #tpu.memory_space<vmem>>, %arg10: memref<1x2xf32, #tpu.memory_space<vmem>>, %arg11: memref<8x2xf32, #tpu.memory_space<vmem>>) attributes {dimension_semantics = [#tpu.dimension_semantics<parallel>], iteration_bounds = array<i64: 1>, scalar_prefetch = 0 : i64, scratch_operands = 0 : i64, tpu.core_type = #tpu.core_type<tc>, window_params = [{transform_indices = @transform_0, window_bounds = array<i64: 8, 23>}, {pipeline_mode = #tpu.pipeline_mode<synchronous>, transform_indices = @transform_1, window_bounds = array<i64: 23, 512>}, {pipeline_mode = #tpu.pipeline_mode<synchronous>, transform_indices = @transform_2, window_bounds = array<i64: 1, 512>}, {pipeline_mode = #tpu.pipeline_mode<synchronous>, transform_indices = @transform_3, window_bounds = array<i64: 256, 256>}, {pipeline_mode = #tpu.pipeline_mode<synchronous>, transform_indices = @transform_4, window_bounds = array<i64: 1, 256>}, {pipeline_mode = #tpu.pipeline_mode<synchronous>, transform_indices = @transform_5, window_bounds = array<i64: 256, 256>}, {pipeline_mode = #tpu.pipeline_mode<synchronous>, transform_indices = @transform_6, window_bounds = array<i64: 1, 256>}, {pipeline_mode = #tpu.pipeline_mode<synchronous>, transform_indices = @transform_7, window_bounds = array<i64: 256, 2>}, {pipeline_mode = #tpu.pipeline_mode<synchronous>, transform_indices = @transform_8, window_bounds = array<i64: 256, 2>}, {pipeline_mode = #tpu.pipeline_mode<synchronous>, transform_indices = @transform_9, window_bounds = array<i64: 1, 2>}, {transform_indices = @transform_10, window_bounds = array<i64: 8, 2>}]} {
    %c0 = arith.constant 0 : index
    %c0_0 = arith.constant 0 : index
    %0 = vector.load %arg1[%c0, %c0_0] : memref<8x23xf32, #tpu.memory_space<vmem>>, vector<8x23xf32>
    %1 = arith.truncf %0 : vector<8x23xf32> to vector<8x23xbf16>
    %c0_1 = arith.constant 0 : index
    %c0_2 = arith.constant 0 : index
    %2 = vector.load %arg2[%c0_1, %c0_2] : memref<23x512xbf16, #tpu.memory_space<vmem>>, vector<23x512xbf16>
    %cst = arith.constant dense<0.000000e+00> : vector<8x512xf32>
    %3 = tpu.matmul %1, %2, %cst {dimension_numbers = #tpu.dot_dimension_numbers<[1], [0], [0], [1], [0, 0, 1, 1], [], []>} : vector<8x23xbf16>, vector<23x512xbf16>, vector<8x512xf32> -> vector<8x512xf32>
    %c0_3 = arith.constant 0 : index
    %c0_4 = arith.constant 0 : index
    %4 = vector.load %arg3[%c0_3, %c0_4] : memref<1x512xf32, #tpu.memory_space<vmem>>, vector<1x512xf32>
    %5 = vector.broadcast %4 : vector<1x512xf32> to vector<8x512xf32>
    %6 = arith.addf %3, %5 : vector<8x512xf32>
    %cst_5 = arith.constant 0.000000e+00 : f32
    %7 = vector.broadcast %cst_5 : f32 to vector<8x512xf32>
    %8 = arith.maximumf %6, %7 : vector<8x512xf32>
    %9 = arith.truncf %8 : vector<8x512xf32> to vector<8x512xbf16>
    %10 = vector.extract_strided_slice %9 {offsets = [0, 0], sizes = [8, 256], strides = [1, 1]} : vector<8x512xbf16> to vector<8x256xbf16>
    %11 = vector.extract_strided_slice %9 {offsets = [0, 256], sizes = [8, 256], strides = [1, 1]} : vector<8x512xbf16> to vector<8x256xbf16>
    %c0_6 = arith.constant 0 : index
    %c0_7 = arith.constant 0 : index
    %12 = vector.load %arg4[%c0_6, %c0_7] : memref<256x256xbf16, #tpu.memory_space<vmem>>, vector<256x256xbf16>
    %cst_8 = arith.constant dense<0.000000e+00> : vector<8x256xf32>
    %13 = tpu.matmul %10, %12, %cst_8 {dimension_numbers = #tpu.dot_dimension_numbers<[1], [0], [0], [1], [0, 0, 1, 1], [], []>} : vector<8x256xbf16>, vector<256x256xbf16>, vector<8x256xf32> -> vector<8x256xf32>
    %c0_9 = arith.constant 0 : index
    %c0_10 = arith.constant 0 : index
    %14 = vector.load %arg5[%c0_9, %c0_10] : memref<1x256xf32, #tpu.memory_space<vmem>>, vector<1x256xf32>
    %15 = vector.broadcast %14 : vector<1x256xf32> to vector<8x256xf32>
    %16 = arith.addf %13, %15 : vector<8x256xf32>
    %cst_11 = arith.constant 0.000000e+00 : f32
    %17 = vector.broadcast %cst_11 : f32 to vector<8x256xf32>
    %18 = arith.maximumf %16, %17 : vector<8x256xf32>
    %19 = arith.truncf %18 : vector<8x256xf32> to vector<8x256xbf16>
    %c0_12 = arith.constant 0 : index
    %c0_13 = arith.constant 0 : index
    %20 = vector.load %arg6[%c0_12, %c0_13] : memref<256x256xbf16, #tpu.memory_space<vmem>>, vector<256x256xbf16>
    %cst_14 = arith.constant dense<0.000000e+00> : vector<8x256xf32>
    %21 = tpu.matmul %11, %20, %cst_14 {dimension_numbers = #tpu.dot_dimension_numbers<[1], [0], [0], [1], [0, 0, 1, 1], [], []>} : vector<8x256xbf16>, vector<256x256xbf16>, vector<8x256xf32> -> vector<8x256xf32>
    %c0_15 = arith.constant 0 : index
    %c0_16 = arith.constant 0 : index
    %22 = vector.load %arg7[%c0_15, %c0_16] : memref<1x256xf32, #tpu.memory_space<vmem>>, vector<1x256xf32>
    %23 = vector.broadcast %22 : vector<1x256xf32> to vector<8x256xf32>
    %24 = arith.addf %21, %23 : vector<8x256xf32>
    %cst_17 = arith.constant 0.000000e+00 : f32
    %25 = vector.broadcast %cst_17 : f32 to vector<8x256xf32>
    %26 = arith.maximumf %24, %25 : vector<8x256xf32>
    %27 = arith.truncf %26 : vector<8x256xf32> to vector<8x256xbf16>
    %c0_18 = arith.constant 0 : index
    %c0_19 = arith.constant 0 : index
    %28 = vector.load %arg8[%c0_18, %c0_19] : memref<256x2xbf16, #tpu.memory_space<vmem>>, vector<256x2xbf16>
    %cst_20 = arith.constant dense<0.000000e+00> : vector<8x2xf32>
    %29 = tpu.matmul %19, %28, %cst_20 {dimension_numbers = #tpu.dot_dimension_numbers<[1], [0], [0], [1], [0, 0, 1, 1], [], []>} : vector<8x256xbf16>, vector<256x2xbf16>, vector<8x2xf32> -> vector<8x2xf32>
    %c0_21 = arith.constant 0 : index
    %c0_22 = arith.constant 0 : index
    %30 = vector.load %arg9[%c0_21, %c0_22] : memref<256x2xbf16, #tpu.memory_space<vmem>>, vector<256x2xbf16>
    %cst_23 = arith.constant dense<0.000000e+00> : vector<8x2xf32>
    %31 = tpu.matmul %27, %30, %cst_23 {dimension_numbers = #tpu.dot_dimension_numbers<[1], [0], [0], [1], [0, 0, 1, 1], [], []>} : vector<8x256xbf16>, vector<256x2xbf16>, vector<8x2xf32> -> vector<8x2xf32>
    %32 = arith.addf %29, %31 : vector<8x2xf32>
    %c0_24 = arith.constant 0 : index
    %c0_25 = arith.constant 0 : index
    %33 = vector.load %arg10[%c0_24, %c0_25] : memref<1x2xf32, #tpu.memory_space<vmem>>, vector<1x2xf32>
    %34 = vector.broadcast %33 : vector<1x2xf32> to vector<8x2xf32>
    %35 = arith.addf %32, %34 : vector<8x2xf32>
    %c0_26 = arith.constant 0 : index
    %c0_27 = arith.constant 0 : index
    %36 = vector.load %arg11[%c0_26, %c0_27] : memref<8x2xf32, #tpu.memory_space<vmem>>, vector<8x2xf32>
    tpu.vector_store %arg11[%c0_26, %c0_27], %35 {strides = array<i32>} : memref<8x2xf32, #tpu.memory_space<vmem>>, vector<8x2xf32>,
    return
  }
  func.func @transform_0(%arg0: i32) -> (i32, i32) {
    %c0_i32 = arith.constant 0 : i32
    %c0_i32_0 = arith.constant 0 : i32
    return %arg0, %c0_i32 : i32, i32
  }
  func.func @transform_1(%arg0: i32) -> (i32, i32) {
    %c0_i32 = arith.constant 0 : i32
    %c0_i32_0 = arith.constant 0 : i32
    %c0_i32_1 = arith.constant 0 : i32
    return %c0_i32, %c0_i32_0 : i32, i32
  }
  func.func @transform_2(%arg0: i32) -> (i32, i32) {
    %c0_i32 = arith.constant 0 : i32
    %c0_i32_0 = arith.constant 0 : i32
    %c0_i32_1 = arith.constant 0 : i32
    return %c0_i32, %c0_i32_0 : i32, i32
  }
  func.func @transform_3(%arg0: i32) -> (i32, i32) {
    %c0_i32 = arith.constant 0 : i32
    %c0_i32_0 = arith.constant 0 : i32
    %c0_i32_1 = arith.constant 0 : i32
    return %c0_i32, %c0_i32_0 : i32, i32
  }
  func.func @transform_4(%arg0: i32) -> (i32, i32) {
    %c0_i32 = arith.constant 0 : i32
    %c0_i32_0 = arith.constant 0 : i32
    %c0_i32_1 = arith.constant 0 : i32
    return %c0_i32, %c0_i32_0 : i32, i32
  }
  func.func @transform_5(%arg0: i32) -> (i32, i32) {
    %c0_i32 = arith.constant 0 : i32
    %c0_i32_0 = arith.constant 0 : i32
    %c0_i32_1 = arith.constant 0 : i32
    return %c0_i32, %c0_i32_0 : i32, i32
  }
  func.func @transform_6(%arg0: i32) -> (i32, i32) {
    %c0_i32 = arith.constant 0 : i32
    %c0_i32_0 = arith.constant 0 : i32
    %c0_i32_1 = arith.constant 0 : i32
    return %c0_i32, %c0_i32_0 : i32, i32
  }
  func.func @transform_7(%arg0: i32) -> (i32, i32) {
    %c0_i32 = arith.constant 0 : i32
    %c0_i32_0 = arith.constant 0 : i32
    %c0_i32_1 = arith.constant 0 : i32
    return %c0_i32, %c0_i32_0 : i32, i32
  }
  func.func @transform_8(%arg0: i32) -> (i32, i32) {
    %c0_i32 = arith.constant 0 : i32
    %c0_i32_0 = arith.constant 0 : i32
    %c0_i32_1 = arith.constant 0 : i32
    return %c0_i32, %c0_i32_0 : i32, i32
  }
  func.func @transform_9(%arg0: i32) -> (i32, i32) {
    %c0_i32 = arith.constant 0 : i32
    %c0_i32_0 = arith.constant 0 : i32
    %c0_i32_1 = arith.constant 0 : i32
    return %c0_i32, %c0_i32_0 : i32, i32
  }
  func.func @transform_10(%arg0: i32) -> (i32, i32) {
    %c0_i32 = arith.constant 0 : i32
    %c0_i32_0 = arith.constant 0 : i32
    return %arg0, %c0_i32 : i32, i32
  }
}

</mosaic_0001>

<llo_original>
// kernel: tpu_custom_call.1
$region0: #{tpu_custom_call.1}
  #allocation0 [shape = 'u32[]', space=smem, size = 0x4, offset = 0x4, fixed_abs, tag = 'smem constant byte address 0x4 - core index']
  #allocation1 [shape = 'u32[144,128]{1,0:T(1,128)}', space=vmem, size = 0x12000, scoped, tag = 'internal scratch']
  %s0 = inlined_call_operand.vmem [shape: f32[8,23], index: 0, kind: input, shape index: {}]
  %s1 = inlined_call_operand.hbm [shape: bf16[23,512], index: 1, kind: input, shape index: {}]
  %s2 = inlined_call_operand.vmem [shape: f32[1,512], index: 2, kind: input, shape index: {}]
  %s3 = inlined_call_operand.vmem [shape: bf16[256,256], index: 3, kind: input, shape index: {}]
  %s4 = inlined_call_operand.vmem [shape: f32[1,256], index: 4, kind: input, shape index: {}]
  %s5 = inlined_call_operand.hbm [shape: bf16[256,256], index: 5, kind: input, shape index: {}]
  %s6 = inlined_call_operand.vmem [shape: f32[1,256], index: 6, kind: input, shape index: {}]
  %s7 = inlined_call_operand.vmem [shape: bf16[256,2], index: 7, kind: input, shape index: {}]
  %s8 = inlined_call_operand.vmem [shape: bf16[256,2], index: 8, kind: input, shape index: {}]
  %s9 = inlined_call_operand.vmem [shape: f32[1,2], index: 9, kind: input, shape index: {}]
  %s10 = inlined_call_operand.vmem [shape: f32[8,2], index: 10, kind: output, shape index: {}]
  %s11 = sld [smem:[#allocation0]]
  $region58: #{tpu_custom_call.1} parent=0
    _
  %s13 = ssub.s32 1, %s11
  %s14 = scalar_select 0, %s13, %s11
  $region1: #{tpu_custom_call.1} parent=0
    #allocation2 [shape = 'u8[24576]{0}', space=vmem, size = 0x6000, scoped, tag = 'input window, operand 1, single buffered']
    #allocation3 [shape = 's32[1]{0}', space=sflag, size = 0x4, scoped, tag = 'scoped memory for tpu_custom_call.1']
    #allocation4 [shape = 'u8[131072]{0}', space=vmem, size = 0x20000, scoped, tag = 'input window, operand 5, single buffered']
    #allocation5 [shape = 's32[1]{0}', space=sflag, size = 0x4, scoped, tag = 'scoped memory for tpu_custom_call.1']
    %15 = vsyncpa [#allocation3], 0
    %16 = vsyncpa [#allocation5], 0
    // Predicated region
    $region2: #{tpu_custom_call.1} parent=1 // pred_check
      _
    $region3: #{tpu_custom_call.1} parent=1 // pred_check_branch
      %18 = sbr.rel (0) target = $region5
    $region4: #{tpu_custom_call.1} parent=1 // pred_region
      _
    $region5: #{tpu_custom_call.1} parent=1 // pred_fallthru
      _
    // Predicated region
    $region6: #{tpu_custom_call.1} parent=1 // pred_check
      _
    $region7: #{tpu_custom_call.1} parent=1 // pred_check_branch
      %20 = sbr.rel (0) target = $region9
    $region8: #{tpu_custom_call.1} parent=1 // pred_region
      %s22 = ssub.s32 768, 768
      %23 = vsyncadd [#allocation3], %s22
      %s24 = sshll.u32 [#allocation2], 4
      %s25 = int_to_ptr.vmem [resolvable:$true] %s24
      %30 = dma.hbm_to_vmem [thread:$0]  %s1, 768, %s25, [#allocation3], 256, 256, 16
    $region9: #{tpu_custom_call.1} parent=1 // pred_fallthru
      _
    // Predicated region
    $region10: #{tpu_custom_call.1} parent=1 // pred_check
      _
    $region11: #{tpu_custom_call.1} parent=1 // pred_check_branch
      %32 = sbr.rel (0) target = $region13
    $region12: #{tpu_custom_call.1} parent=1 // pred_region
      _
    $region13: #{tpu_custom_call.1} parent=1 // pred_fallthru
      _
    // Predicated region
    $region14: #{tpu_custom_call.1} parent=1 // pred_check
      _
    $region15: #{tpu_custom_call.1} parent=1 // pred_check_branch
      %34 = sbr.rel (0) target = $region17
    $region16: #{tpu_custom_call.1} parent=1 // pred_region
      _
    $region17: #{tpu_custom_call.1} parent=1 // pred_fallthru
      _
    // Predicated region
    $region18: #{tpu_custom_call.1} parent=1 // pred_check
      _
    $region19: #{tpu_custom_call.1} parent=1 // pred_check_branch
      %36 = sbr.rel (0) target = $region21
    $region20: #{tpu_custom_call.1} parent=1 // pred_region
      _
    $region21: #{tpu_custom_call.1} parent=1 // pred_fallthru
      _
    // Predicated region
    $region22: #{tpu_custom_call.1} parent=1 // pred_check
      _
    $region23: #{tpu_custom_call.1} parent=1 // pred_check_branch
      %38 = sbr.rel (0) target = $region25
    $region24: #{tpu_custom_call.1} parent=1 // pred_region
      %s40 = ssub.s32 4096, 4096
      %41 = vsyncadd [#allocation5], %s40
      %s42 = sshll.u32 [#allocation4], 4
      %s43 = int_to_ptr.vmem [resolvable:$true] %s42
      %48 = dma.hbm_to_vmem [thread:$0]  %s5, 4096, %s43, [#allocation5], 128, 128, 8
    $region25: #{tpu_custom_call.1} parent=1 // pred_fallthru
      _
    // Predicated region
    $region26: #{tpu_custom_call.1} parent=1 // pred_check
      _
    $region27: #{tpu_custom_call.1} parent=1 // pred_check_branch
      %50 = sbr.rel (0) target = $region29
    $region28: #{tpu_custom_call.1} parent=1 // pred_region
      _
    $region29: #{tpu_custom_call.1} parent=1 // pred_fallthru
      _
    // Predicated region
    $region30: #{tpu_custom_call.1} parent=1 // pred_check
      _
    $region31: #{tpu_custom_call.1} parent=1 // pred_check_branch
      %52 = sbr.rel (0) target = $region33
    $region32: #{tpu_custom_call.1} parent=1 // pred_region
      _
    $region33: #{tpu_custom_call.1} parent=1 // pred_fallthru
      _
    // Predicated region
    $region34: #{tpu_custom_call.1} parent=1 // pred_check
      _
    $region35: #{tpu_custom_call.1} parent=1 // pred_check_branch
      %54 = sbr.rel (0) target = $region37
    $region36: #{tpu_custom_call.1} parent=1 // pred_region
      _
    $region37: #{tpu_custom_call.1} parent=1 // pred_fallthru
      _
    // Predicated region
    $region38: #{tpu_custom_call.1} parent=1 // pred_check
      _
    $region39: #{tpu_custom_call.1} parent=1 // pred_check_branch
      %56 = sbr.rel (0) target = $region41
    $region40: #{tpu_custom_call.1} parent=1 // pred_region
      _
    $region41: #{tpu_custom_call.1} parent=1 // pred_fallthru
      _
    // Predicated region
    $region42: #{tpu_custom_call.1} parent=1 // pred_check
      _
    $region43: #{tpu_custom_call.1} parent=1 // pred_check_branch
      %58 = sbr.rel (0) target = $region45
    $region44: #{tpu_custom_call.1} parent=1 // pred_region
      %59 = dma.done [#allocation3], 768
    $region45: #{tpu_custom_call.1} parent=1 // pred_fallthru
      _
    // Predicated region
    $region46: #{tpu_custom_call.1} parent=1 // pred_check
      _
    $region47: #{tpu_custom_call.1} parent=1 // pred_check_branch
      %61 = sbr.rel (0) target = $region49
    $region48: #{tpu_custom_call.1} parent=1 // pred_region
      %62 = dma.done [#allocation5], 4096
    $region49: #{tpu_custom_call.1} parent=1 // pred_fallthru
      _
    %v64 = vld [vmem:[%s0] sm:$0xff]
    %v65 = vpack.c.bf16 %v64, %v64
    %v66 = vld [vmem:[#allocation2] sm:$0xff]
    %v67 = vld [vmem:[#allocation2 + $0x8] sm:$0xff]
    %v68 = vld [vmem:[#allocation2 + $0x10] sm:$0xff]
    %v69 = vld [vmem:[#allocation2 + $0x18] sm:$0xff]
    %v70 = vld [vmem:[#allocation2 + $0x20] sm:$0xff]
    %v71 = vld [vmem:[#allocation2 + $0x28] sm:$0xff]
    %v72 = vld [vmem:[%s2] sm:$0xf]
    %v74 = vlaneseq
    %v75 = vshrl.u32 %v74, 7
    %v76 = vsub.s32 0, %v75
    %v77 = vrot.slane %v72, %v76
    %v78 = vlaneseq
    %v79 = vshrl.u32 %v78, 7
    %v80 = vsub.s32 1, %v79
    %v81 = vrot.slane %v72, %v80
    %v82 = vlaneseq
    %v83 = vshrl.u32 %v82, 7
    %v84 = vsub.s32 2, %v83
    %v85 = vrot.slane %v72, %v84
    %v86 = vlaneseq
    %v87 = vshrl.u32 %v86, 7
    %v88 = vsub.s32 3, %v87
    %v89 = vrot.slane %v72, %v88
    %v100 = vunpack.c.l.b16 %v66
    %v101 = vunpack.c.h.b16 %v66
    %v102 = vunpack.c.l.b16 %v67
    %v103 = vunpack.c.h.b16 %v67
    %v104 = vunpack.c.l.b16 %v68
    %v105 = vunpack.c.h.b16 %v68
    %v106 = vunpack.c.l.b16 %v69
    %v107 = vunpack.c.h.b16 %v69
    %v108 = vunpack.c.l.b16 %v70
    %v109 = vunpack.c.h.b16 %v70
    %v110 = vunpack.c.l.b16 %v71
    %v111 = vunpack.c.h.b16 %v71
    %v112 = vpack.c.b16 %v104, %v100
    %v113 = vpack.c.b16 %v105, %v101
    %v114 = vpack.c.b16 %v106, %v102
    %v115 = vpack.c.b16 %v107, %v103
    %v116 = vpack.c.b16 %v108, %v108
    %v117 = vpack.c.b16 %v109, %v109
    %v118 = vpack.c.b16 %v110, %v110
    %v119 = vpack.c.b16 %v111, %v111
    %vm124 = vcmask 187392
    %v126 = vsel %vm124, %v65, 0
    %vm128 = vcmask 1042432
    %vm129 = vcmask 1043456
    %v130 = vsel %vm128, 4294967295, 65535
    %v131 = vsel %vm129, %v130, 0
    %v133 = vand.u32 %v116, %v131
    %v136 = vand.u32 %v117, %v131
    %v139 = vand.u32 %v118, %v131
    %v142 = vand.u32 %v119, %v131
    %144 = vmatprep.subr.bf16.mxu0 %v113
    %145 = vmatpush1.bf16.msra.mxu0 %v112
    %146 = vmatprep.subr.bf16.mxu0 %v136
    %147 = vmatpush1.bf16.msra.mxu0 %v133
    %148 = vmatprep.subr.bf16.mxu0 0
    %149 = vmatpush1.bf16.msra.mxu0 0
    %150 = vmatprep.subr.bf16.mxu0 0
    %151 = vmatpush1.bf16.msra.mxu0 0
    %152 = vmatprep.subr.bf16.mxu0 0
    %153 = vmatpush1.bf16.msra.mxu0 0
    %154 = vmatprep.subr.bf16.mxu0 0
    %155 = vmatpush1.bf16.msra.mxu0 0
    %156 = vmatprep.subr.bf16.mxu0 0
    %157 = vmatpush1.bf16.msra.mxu0 0
    %158 = vmatprep.subr.bf16.mxu0 0
    %159 = vmatpush1.bf16.msra.mxu0 0
    %160 = vmatprep.subr.bf16.mxu0 0
    %161 = vmatpush1.bf16.msra.mxu0 0
    %162 = vmatprep.subr.bf16.mxu0 0
    %163 = vmatpush1.bf16.msra.mxu0 0
    %164 = vmatprep.subr.bf16.mxu0 0
    %165 = vmatpush1.bf16.msra.mxu0 0
    %166 = vmatprep.subr.bf16.mxu0 0
    %167 = vmatpush1.bf16.msra.mxu0 0
    %168 = vmatprep.subr.bf16.mxu0 0
    %169 = vmatpush1.bf16.msra.mxu0 0
    %170 = vmatprep.subr.bf16.mxu0 0
    %171 = vmatpush1.bf16.msra.mxu0 0
    %172 = vmatprep.subr.bf16.mxu0 0
    %173 = vmatpush1.bf16.msra.mxu0 0
    %174 = vmatprep.subr.bf16.mxu0 0
    %175 = vmatpush1.bf16.msra.mxu0 0
    %176 = vmatprep.mubr.bf16.mxu0 0
    %177 = vmatmul.mubr.bf16.gmra.mrb[0].mxu0 %v126
    %v178 = vpop.f32.mrb[0].mxu0
    %v179 = vadd.f32 %v77, %v178
    %v180 = vpop.f32.mrb[0].mxu0
    %v181 = vadd.f32 %v81, %v180
    %v182 = vpop.f32.mrb[0].mxu0
    %v183 = vpop.f32.mrb[0].mxu0
    %184 = vdwg.mxu0
    %185 = vmatprep.subr.bf16.mxu0 %v115
    %186 = vmatpush1.bf16.msra.mxu0 %v114
    %187 = vmatprep.subr.bf16.mxu0 %v142
    %188 = vmatpush1.bf16.msra.mxu0 %v139
    %189 = vmatprep.subr.bf16.mxu0 0
    %190 = vmatpush1.bf16.msra.mxu0 0
    %191 = vmatprep.subr.bf16.mxu0 0
    %192 = vmatpush1.bf16.msra.mxu0 0
    %193 = vmatprep.subr.bf16.mxu0 0
    %194 = vmatpush1.bf16.msra.mxu0 0
    %195 = vmatprep.subr.bf16.mxu0 0
    %196 = vmatpush1.bf16.msra.mxu0 0
    %197 = vmatprep.subr.bf16.mxu0 0
    %198 = vmatpush1.bf16.msra.mxu0 0
    %199 = vmatprep.subr.bf16.mxu0 0
    %200 = vmatpush1.bf16.msra.mxu0 0
    %201 = vmatprep.subr.bf16.mxu0 0
    %202 = vmatpush1.bf16.msra.mxu0 0
    %203 = vmatprep.subr.bf16.mxu0 0
    %204 = vmatpush1.bf16.msra.mxu0 0
    %205 = vmatprep.subr.bf16.mxu0 0
    %206 = vmatpush1.bf16.msra.mxu0 0
    %207 = vmatprep.subr.bf16.mxu0 0
    %208 = vmatpush1.bf16.msra.mxu0 0
    %209 = vmatprep.subr.bf16.mxu0 0
    %210 = vmatpush1.bf16.msra.mxu0 0
    %211 = vmatprep.subr.bf16.mxu0 0
    %212 = vmatpush1.bf16.msra.mxu0 0
    %213 = vmatprep.subr.bf16.mxu0 0
    %214 = vmatpush1.bf16.msra.mxu0 0
    %215 = vmatprep.subr.bf16.mxu0 0
    %216 = vmatpush1.bf16.msra.mxu0 0
    %217 = vmatprep.mubr.bf16.mxu0 0
    %218 = vmatmul.mubr.bf16.gmra.mrb[0].mxu0 %v126
    %v219 = vpop.f32.mrb[0].mxu0
    %v220 = vadd.f32 %v85, %v219
    %v221 = vpop.f32.mrb[0].mxu0
    %v222 = vadd.f32 %v89, %v221
    %v223 = vpop.f32.mrb[0].mxu0
    %v224 = vpop.f32.mrb[0].mxu0
    %225 = vdwg.mxu0
    %v226 = vmax.f32 %v179, 0.0
    %v227 = vmax.f32 %v181, 0.0
    %v228 = vmax.f32 %v220, 0.0
    %v229 = vmax.f32 %v222, 0.0
    %v230 = vpack.c.bf16 %v226, %v226
    %v231 = vpack.c.bf16 %v227, %v227
    %v232 = vpack.c.bf16 %v228, %v228
    %v233 = vpack.c.bf16 %v229, %v229
    %v234 = vld [vmem:[%s3] sm:$0xff]
    %v235 = vld [vmem:[%s3 + $0x8] sm:$0xff]
    %v236 = vld [vmem:[%s3 + $0x10] sm:$0xff]
    %v237 = vld [vmem:[%s3 + $0x18] sm:$0xff]
    %v238 = vld [vmem:[%s3 + $0x20] sm:$0xff]
    %v239 = vld [vmem:[%s3 + $0x28] sm:$0xff]
    %v240 = vld [vmem:[%s3 + $0x30] sm:$0xff]
    %v241 = vld [vmem:[%s3 + $0x38] sm:$0xff]
    %v242 = vld [vmem:[%s3 + $0x40] sm:$0xff]
    %v243 = vld [vmem:[%s3 + $0x48] sm:$0xff]
    %v244 = vld [vmem:[%s3 + $0x50] sm:$0xff]
    %v245 = vld [vmem:[%s3 + $0x58] sm:$0xff]
    %v246 = vld [vmem:[%s3 + $0x60] sm:$0xff]
    %v247 = vld [vmem:[%s3 + $0x68] sm:$0xff]
    %v248 = vld [vmem:[%s3 + $0x70] sm:$0xff]
    %v249 = vld [vmem:[%s3 + $0x78] sm:$0xff]
    %v250 = vld [vmem:[%s3 + $0x80] sm:$0xff]
    %v251 = vld [vmem:[%s3 + $0x88] sm:$0xff]
    %v252 = vld [vmem:[%s3 + $0x90] sm:$0xff]
    %v253 = vld [vmem:[%s3 + $0x98] sm:$0xff]
    %v254 = vld [vmem:[%s3 + $0xa0] sm:$0xff]
    %v255 = vld [vmem:[%s3 + $0xa8] sm:$0xff]
    %v256 = vld [vmem:[%s3 + $0xb0] sm:$0xff]
    %v257 = vld [vmem:[%s3 + $0xb8] sm:$0xff]
    %v258 = vld [vmem:[%s3 + $0xc0] sm:$0xff]
    %v259 = vld [vmem:[%s3 + $0xc8] sm:$0xff]
    %v260 = vld [vmem:[%s3 + $0xd0] sm:$0xff]
    %v261 = vld [vmem:[%s3 + $0xd8] sm:$0xff]
    %v262 = vld [vmem:[%s3 + $0xe0] sm:$0xff]
    %v263 = vld [vmem:[%s3 + $0xe8] sm:$0xff]
    %v264 = vld [vmem:[%s3 + $0xf0] sm:$0xff]
    %v265 = vld [vmem:[%s3 + $0xf8] sm:$0xff]
    %v266 = vld [vmem:[%s4] sm:$0x3]
    %v268 = vlaneseq
    %v269 = vshrl.u32 %v268, 7
    %v270 = vsub.s32 0, %v269
    %v271 = vrot.slane %v266, %v270
    %v272 = vlaneseq
    %v273 = vshrl.u32 %v272, 7
    %v274 = vsub.s32 1, %v273
    %v275 = vrot.slane %v266, %v274
    %v310 = vunpack.c.l.b16 %v234
    %v311 = vunpack.c.h.b16 %v234
    %v312 = vunpack.c.l.b16 %v235
    %v313 = vunpack.c.h.b16 %v235
    %v314 = vunpack.c.l.b16 %v236
    %v315 = vunpack.c.h.b16 %v236
    %v316 = vunpack.c.l.b16 %v237
    %v317 = vunpack.c.h.b16 %v237
    %v318 = vunpack.c.l.b16 %v238
    %v319 = vunpack.c.h.b16 %v238
    %v320 = vunpack.c.l.b16 %v239
    %v321 = vunpack.c.h.b16 %v239
    %v322 = vunpack.c.l.b16 %v240
    %v323 = vunpack.c.h.b16 %v240
    %v324 = vunpack.c.l.b16 %v241
    %v325 = vunpack.c.h.b16 %v241
    %v326 = vunpack.c.l.b16 %v242
    %v327 = vunpack.c.h.b16 %v242
    %v328 = vunpack.c.l.b16 %v243
    %v329 = vunpack.c.h.b16 %v243
    %v330 = vunpack.c.l.b16 %v244
    %v331 = vunpack.c.h.b16 %v244
    %v332 = vunpack.c.l.b16 %v245
    %v333 = vunpack.c.h.b16 %v245
    %v334 = vunpack.c.l.b16 %v246
    %v335 = vunpack.c.h.b16 %v246
    %v336 = vunpack.c.l.b16 %v247
    %v337 = vunpack.c.h.b16 %v247
    %v338 = vunpack.c.l.b16 %v248
    %v339 = vunpack.c.h.b16 %v248
    %v340 = vunpack.c.l.b16 %v249
    %v341 = vunpack.c.h.b16 %v249
    %v342 = vunpack.c.l.b16 %v250
    %v343 = vunpack.c.h.b16 %v250
    %v344 = vunpack.c.l.b16 %v251
    %v345 = vunpack.c.h.b16 %v251
    %v346 = vunpack.c.l.b16 %v252
    %v347 = vunpack.c.h.b16 %v252
    %v348 = vunpack.c.l.b16 %v253
    %v349 = vunpack.c.h.b16 %v253
    %v350 = vunpack.c.l.b16 %v254
    %v351 = vunpack.c.h.b16 %v254
    %v352 = vunpack.c.l.b16 %v255
    %v353 = vunpack.c.h.b16 %v255
    %v354 = vunpack.c.l.b16 %v256
    %v355 = vunpack.c.h.b16 %v256
    %v356 = vunpack.c.l.b16 %v257
    %v357 = vunpack.c.h.b16 %v257
    %v358 = vunpack.c.l.b16 %v258
    %v359 = vunpack.c.h.b16 %v258
    %v360 = vunpack.c.l.b16 %v259
    %v361 = vunpack.c.h.b16 %v259
    %v362 = vunpack.c.l.b16 %v260
    %v363 = vunpack.c.h.b16 %v260
    %v364 = vunpack.c.l.b16 %v261
    %v365 = vunpack.c.h.b16 %v261
    %v366 = vunpack.c.l.b16 %v262
    %v367 = vunpack.c.h.b16 %v262
    %v368 = vunpack.c.l.b16 %v263
    %v369 = vunpack.c.h.b16 %v263
    %v370 = vunpack.c.l.b16 %v264
    %v371 = vunpack.c.h.b16 %v264
    %v372 = vunpack.c.l.b16 %v265
    %v373 = vunpack.c.h.b16 %v265
    %v374 = vpack.c.b16 %v312, %v310
    %v375 = vpack.c.b16 %v313, %v311
    %v376 = vpack.c.b16 %v316, %v314
    %v377 = vpack.c.b16 %v317, %v315
    %v378 = vpack.c.b16 %v320, %v318
    %v379 = vpack.c.b16 %v321, %v319
    %v380 = vpack.c.b16 %v324, %v322
    %v381 = vpack.c.b16 %v325, %v323
    %v382 = vpack.c.b16 %v328, %v326
    %v383 = vpack.c.b16 %v329, %v327
    %v384 = vpack.c.b16 %v332, %v330
    %v385 = vpack.c.b16 %v333, %v331
    %v386 = vpack.c.b16 %v336, %v334
    %v387 = vpack.c.b16 %v337, %v335
    %v388 = vpack.c.b16 %v340, %v338
    %v389 = vpack.c.b16 %v341, %v339
    %v390 = vpack.c.b16 %v344, %v342
    %v391 = vpack.c.b16 %v345, %v343
    %v392 = vpack.c.b16 %v348, %v346
    %v393 = vpack.c.b16 %v349, %v347
    %v394 = vpack.c.b16 %v352, %v350
    %v395 = vpack.c.b16 %v353, %v351
    %v396 = vpack.c.b16 %v356, %v354
    %v397 = vpack.c.b16 %v357, %v355
    %v398 = vpack.c.b16 %v360, %v358
    %v399 = vpack.c.b16 %v361, %v359
    %v400 = vpack.c.b16 %v364, %v362
    %v401 = vpack.c.b16 %v365, %v363
    %v402 = vpack.c.b16 %v368, %v366
    %v403 = vpack.c.b16 %v369, %v367
    %v404 = vpack.c.b16 %v372, %v370
    %v405 = vpack.c.b16 %v373, %v371
    %438 = vmatprep.subr.bf16.mxu0 %v375
    %439 = vmatpush1.bf16.msra.mxu0 %v374
    %440 = vmatprep.subr.bf16.mxu0 %v377
    %441 = vmatpush1.bf16.msra.mxu0 %v376
    %442 = vmatprep.subr.bf16.mxu0 %v379
    %443 = vmatpush1.bf16.msra.mxu0 %v378
    %444 = vmatprep.subr.bf16.mxu0 %v381
    %445 = vmatpush1.bf16.msra.mxu0 %v380
    %446 = vmatprep.subr.bf16.mxu0 %v383
    %447 = vmatpush1.bf16.msra.mxu0 %v382
    %448 = vmatprep.subr.bf16.mxu0 %v385
    %449 = vmatpush1.bf16.msra.mxu0 %v384
    %450 = vmatprep.subr.bf16.mxu0 %v387
    %451 = vmatpush1.bf16.msra.mxu0 %v386
    %452 = vmatprep.subr.bf16.mxu0 %v389
    %453 = vmatpush1.bf16.msra.mxu0 %v388
    %454 = vmatprep.subr.bf16.mxu0 %v391
    %455 = vmatpush1.bf16.msra.mxu0 %v390
    %456 = vmatprep.subr.bf16.mxu0 %v393
    %457 = vmatpush1.bf16.msra.mxu0 %v392
    %458 = vmatprep.subr.bf16.mxu0 %v395
    %459 = vmatpush1.bf16.msra.mxu0 %v394
    %460 = vmatprep.subr.bf16.mxu0 %v397
    %461 = vmatpush1.bf16.msra.mxu0 %v396
    %462 = vmatprep.subr.bf16.mxu0 %v399
    %463 = vmatpush1.bf16.msra.mxu0 %v398
    %464 = vmatprep.subr.bf16.mxu0 %v401
    %465 = vmatpush1.bf16.msra.mxu0 %v400
    %466 = vmatprep.subr.bf16.mxu0 %v403
    %467 = vmatpush1.bf16.msra.mxu0 %v402
    %468 = vmatprep.subr.bf16.mxu0 %v405
    %469 = vmatpush1.bf16.msra.mxu0 %v404
    %470 = vmatprep.mubr.bf16.mxu0 %v231
    %471 = vmatmul.mubr.bf16.gmra.mrb[0].mxu0 %v230
    %v472 = vpop.f32.mrb[0].mxu0
    %v473 = vadd.f32 %v271, %v472
    %v474 = vpop.f32.mrb[0].mxu0
    %v475 = vadd.f32 %v275, %v474
    %v476 = vpop.f32.mrb[0].mxu0
    %v477 = vpop.f32.mrb[0].mxu0
    %478 = vdwg.mxu0
    %v479 = vmax.f32 %v473, 0.0
    %v480 = vmax.f32 %v475, 0.0
    %v481 = vpack.c.bf16 %v479, %v479
    %v482 = vpack.c.bf16 %v480, %v480
    %v483 = vld [vmem:[#allocation4] sm:$0xff]
    %v484 = vld [vmem:[#allocation4 + $0x8] sm:$0xff]
    %v485 = vld [vmem:[#allocation4 + $0x10] sm:$0xff]
    %v486 = vld [vmem:[#allocation4 + $0x18] sm:$0xff]
    %v487 = vld [vmem:[#allocation4 + $0x20] sm:$0xff]
    %v488 = vld [vmem:[#allocation4 + $0x28] sm:$0xff]
    %v489 = vld [vmem:[#allocation4 + $0x30] sm:$0xff]
    %v490 = vld [vmem:[#allocation4 + $0x38] sm:$0xff]
    %v491 = vld [vmem:[#allocation4 + $0x40] sm:$0xff]
    %v492 = vld [vmem:[#allocation4 + $0x48] sm:$0xff]
    %v493 = vld [vmem:[#allocation4 + $0x50] sm:$0xff]
    %v494 = vld [vmem:[#allocation4 + $0x58] sm:$0xff]
    %v495 = vld [vmem:[#allocation4 + $0x60] sm:$0xff]
    %v496 = vld [vmem:[#allocation4 + $0x68] sm:$0xff]
    %v497 = vld [vmem:[#allocation4 + $0x70] sm:$0xff]
    %v498 = vld [vmem:[#allocation4 + $0x78] sm:$0xff]
    %v499 = vld [vmem:[#allocation4 + $0x80] sm:$0xff]
    %v500 = vld [vmem:[#allocation4 + $0x88] sm:$0xff]
    %v501 = vld [vmem:[#allocation4 + $0x90] sm:$0xff]
    %v502 = vld [vmem:[#allocation4 + $0x98] sm:$0xff]
    %v503 = vld [vmem:[#allocation4 + $0xa0] sm:$0xff]
    %v504 = vld [vmem:[#allocation4 + $0xa8] sm:$0xff]
    %v505 = vld [vmem:[#allocation4 + $0xb0] sm:$0xff]
    %v506 = vld [vmem:[#allocation4 + $0xb8] sm:$0xff]
    %v507 = vld [vmem:[#allocation4 + $0xc0] sm:$0xff]
    %v508 = vld [vmem:[#allocation4 + $0xc8] sm:$0xff]
    %v509 = vld [vmem:[#allocation4 + $0xd0] sm:$0xff]
    %v510 = vld [vmem:[#allocation4 + $0xd8] sm:$0xff]
    %v511 = vld [vmem:[#allocation4 + $0xe0] sm:$0xff]
    %v512 = vld [vmem:[#allocation4 + $0xe8] sm:$0xff]
    %v513 = vld [vmem:[#allocation4 + $0xf0] sm:$0xff]
    %v514 = vld [vmem:[#allocation4 + $0xf8] sm:$0xff]
    %v515 = vld [vmem:[%s6] sm:$0x3]
    %v517 = vlaneseq
    %v518 = vshrl.u32 %v517, 7
    %v519 = vsub.s32 0, %v518
    %v520 = vrot.slane %v515, %v519
    %v521 = vlaneseq
    %v522 = vshrl.u32 %v521, 7
    %v523 = vsub.s32 1, %v522
    %v524 = vrot.slane %v515, %v523
    %v559 = vunpack.c.l.b16 %v483
    %v560 = vunpack.c.h.b16 %v483
    %v561 = vunpack.c.l.b16 %v484
    %v562 = vunpack.c.h.b16 %v484
    %v563 = vunpack.c.l.b16 %v485
    %v564 = vunpack.c.h.b16 %v485
    %v565 = vunpack.c.l.b16 %v486
    %v566 = vunpack.c.h.b16 %v486
    %v567 = vunpack.c.l.b16 %v487
    %v568 = vunpack.c.h.b16 %v487
    %v569 = vunpack.c.l.b16 %v488
    %v570 = vunpack.c.h.b16 %v488
    %v571 = vunpack.c.l.b16 %v489
    %v572 = vunpack.c.h.b16 %v489
    %v573 = vunpack.c.l.b16 %v490
    %v574 = vunpack.c.h.b16 %v490
    %v575 = vunpack.c.l.b16 %v491
    %v576 = vunpack.c.h.b16 %v491
    %v577 = vunpack.c.l.b16 %v492
    %v578 = vunpack.c.h.b16 %v492
    %v579 = vunpack.c.l.b16 %v493
    %v580 = vunpack.c.h.b16 %v493
    %v581 = vunpack.c.l.b16 %v494
    %v582 = vunpack.c.h.b16 %v494
    %v583 = vunpack.c.l.b16 %v495
    %v584 = vunpack.c.h.b16 %v495
    %v585 = vunpack.c.l.b16 %v496
    %v586 = vunpack.c.h.b16 %v496
    %v587 = vunpack.c.l.b16 %v497
    %v588 = vunpack.c.h.b16 %v497
    %v589 = vunpack.c.l.b16 %v498
    %v590 = vunpack.c.h.b16 %v498
    %v591 = vunpack.c.l.b16 %v499
    %v592 = vunpack.c.h.b16 %v499
    %v593 = vunpack.c.l.b16 %v500
    %v594 = vunpack.c.h.b16 %v500
    %v595 = vunpack.c.l.b16 %v501
    %v596 = vunpack.c.h.b16 %v501
    %v597 = vunpack.c.l.b16 %v502
    %v598 = vunpack.c.h.b16 %v502
    %v599 = vunpack.c.l.b16 %v503
    %v600 = vunpack.c.h.b16 %v503
    %v601 = vunpack.c.l.b16 %v504
    %v602 = vunpack.c.h.b16 %v504
    %v603 = vunpack.c.l.b16 %v505
    %v604 = vunpack.c.h.b16 %v505
    %v605 = vunpack.c.l.b16 %v506
    %v606 = vunpack.c.h.b16 %v506
    %v607 = vunpack.c.l.b16 %v507
    %v608 = vunpack.c.h.b16 %v507
    %v609 = vunpack.c.l.b16 %v508
    %v610 = vunpack.c.h.b16 %v508
    %v611 = vunpack.c.l.b16 %v509
    %v612 = vunpack.c.h.b16 %v509
    %v613 = vunpack.c.l.b16 %v510
    %v614 = vunpack.c.h.b16 %v510
    %v615 = vunpack.c.l.b16 %v511
    %v616 = vunpack.c.h.b16 %v511
    %v617 = vunpack.c.l.b16 %v512
    %v618 = vunpack.c.h.b16 %v512
    %v619 = vunpack.c.l.b16 %v513
    %v620 = vunpack.c.h.b16 %v513
    %v621 = vunpack.c.l.b16 %v514
    %v622 = vunpack.c.h.b16 %v514
    %v623 = vpack.c.b16 %v561, %v559
    %v624 = vpack.c.b16 %v562, %v560
    %v625 = vpack.c.b16 %v565, %v563
    %v626 = vpack.c.b16 %v566, %v564
    %v627 = vpack.c.b16 %v569, %v567
    %v628 = vpack.c.b16 %v570, %v568
    %v629 = vpack.c.b16 %v573, %v571
    %v630 = vpack.c.b16 %v574, %v572
    %v631 = vpack.c.b16 %v577, %v575
    %v632 = vpack.c.b16 %v578, %v576
    %v633 = vpack.c.b16 %v581, %v579
    %v634 = vpack.c.b16 %v582, %v580
    %v635 = vpack.c.b16 %v585, %v583
    %v636 = vpack.c.b16 %v586, %v584
    %v637 = vpack.c.b16 %v589, %v587
    %v638 = vpack.c.b16 %v590, %v588
    %v639 = vpack.c.b16 %v593, %v591
    %v640 = vpack.c.b16 %v594, %v592
    %v641 = vpack.c.b16 %v597, %v595
    %v642 = vpack.c.b16 %v598, %v596
    %v643 = vpack.c.b16 %v601, %v599
    %v644 = vpack.c.b16 %v602, %v600
    %v645 = vpack.c.b16 %v605, %v603
    %v646 = vpack.c.b16 %v606, %v604
    %v647 = vpack.c.b16 %v609, %v607
    %v648 = vpack.c.b16 %v610, %v608
    %v649 = vpack.c.b16 %v613, %v611
    %v650 = vpack.c.b16 %v614, %v612
    %v651 = vpack.c.b16 %v617, %v615
    %v652 = vpack.c.b16 %v618, %v616
    %v653 = vpack.c.b16 %v621, %v619
    %v654 = vpack.c.b16 %v622, %v620
    %687 = vmatprep.subr.bf16.mxu0 %v624
    %688 = vmatpush1.bf16.msra.mxu0 %v623
    %689 = vmatprep.subr.bf16.mxu0 %v626
    %690 = vmatpush1.bf16.msra.mxu0 %v625
    %691 = vmatprep.subr.bf16.mxu0 %v628
    %692 = vmatpush1.bf16.msra.mxu0 %v627
    %693 = vmatprep.subr.bf16.mxu0 %v630
    %694 = vmatpush1.bf16.msra.mxu0 %v629
    %695 = vmatprep.subr.bf16.mxu0 %v632
    %696 = vmatpush1.bf16.msra.mxu0 %v631
    %697 = vmatprep.subr.bf16.mxu0 %v634
    %698 = vmatpush1.bf16.msra.mxu0 %v633
    %699 = vmatprep.subr.bf16.mxu0 %v636
    %700 = vmatpush1.bf16.msra.mxu0 %v635
    %701 = vmatprep.subr.bf16.mxu0 %v638
    %702 = vmatpush1.bf16.msra.mxu0 %v637
    %703 = vmatprep.subr.bf16.mxu0 %v640
    %704 = vmatpush1.bf16.msra.mxu0 %v639
    %705 = vmatprep.subr.bf16.mxu0 %v642
    %706 = vmatpush1.bf16.msra.mxu0 %v641
    %707 = vmatprep.subr.bf16.mxu0 %v644
    %708 = vmatpush1.bf16.msra.mxu0 %v643
    %709 = vmatprep.subr.bf16.mxu0 %v646
    %710 = vmatpush1.bf16.msra.mxu0 %v645
    %711 = vmatprep.subr.bf16.mxu0 %v648
    %712 = vmatpush1.bf16.msra.mxu0 %v647
    %713 = vmatprep.subr.bf16.mxu0 %v650
    %714 = vmatpush1.bf16.msra.mxu0 %v649
    %715 = vmatprep.subr.bf16.mxu0 %v652
    %716 = vmatpush1.bf16.msra.mxu0 %v651
    %717 = vmatprep.subr.bf16.mxu0 %v654
    %718 = vmatpush1.bf16.msra.mxu0 %v653
    %719 = vmatprep.mubr.bf16.mxu0 %v233
    %720 = vmatmul.mubr.bf16.gmra.mrb[0].mxu0 %v232
    %v721 = vpop.f32.mrb[0].mxu0
    %v722 = vadd.f32 %v520, %v721
    %v723 = vpop.f32.mrb[0].mxu0
    %v724 = vadd.f32 %v524, %v723
    %v725 = vpop.f32.mrb[0].mxu0
    %v726 = vpop.f32.mrb[0].mxu0
    %727 = vdwg.mxu0
    %v728 = vmax.f32 %v722, 0.0
    %v729 = vmax.f32 %v724, 0.0
    %v730 = vpack.c.bf16 %v728, %v728
    %v731 = vpack.c.bf16 %v729, %v729
    %v732 = vld [vmem:[%s7] sm:$0xf]
    %v733 = vld [vmem:[%s7 + $0x4] sm:$0xf]
    %v734 = vld [vmem:[%s7 + $0x8] sm:$0xf]
    %v735 = vld [vmem:[%s7 + $0xc] sm:$0xf]
    %v736 = vld [vmem:[%s7 + $0x10] sm:$0xf]
    %v737 = vld [vmem:[%s7 + $0x14] sm:$0xf]
    %v738 = vld [vmem:[%s7 + $0x18] sm:$0xf]
    %v739 = vld [vmem:[%s7 + $0x1c] sm:$0xf]
    %v740 = vld [vmem:[%s7 + $0x20] sm:$0xf]
    %v741 = vld [vmem:[%s7 + $0x24] sm:$0xf]
    %v742 = vld [vmem:[%s7 + $0x28] sm:$0xf]
    %v743 = vld [vmem:[%s7 + $0x2c] sm:$0xf]
    %v744 = vld [vmem:[%s7 + $0x30] sm:$0xf]
    %v745 = vld [vmem:[%s7 + $0x34] sm:$0xf]
    %v746 = vld [vmem:[%s7 + $0x38] sm:$0xf]
    %v747 = vld [vmem:[%s7 + $0x3c] sm:$0xf]
    %v748 = vld [vmem:[%s7 + $0x40] sm:$0xf]
    %v749 = vld [vmem:[%s7 + $0x44] sm:$0xf]
    %v750 = vld [vmem:[%s7 + $0x48] sm:$0xf]
    %v751 = vld [vmem:[%s7 + $0x4c] sm:$0xf]
    %v752 = vld [vmem:[%s7 + $0x50] sm:$0xf]
    %v753 = vld [vmem:[%s7 + $0x54] sm:$0xf]
    %v754 = vld [vmem:[%s7 + $0x58] sm:$0xf]
    %v755 = vld [vmem:[%s7 + $0x5c] sm:$0xf]
    %v756 = vld [vmem:[%s7 + $0x60] sm:$0xf]
    %v757 = vld [vmem:[%s7 + $0x64] sm:$0xf]
    %v758 = vld [vmem:[%s7 + $0x68] sm:$0xf]
    %v759 = vld [vmem:[%s7 + $0x6c] sm:$0xf]
    %v760 = vld [vmem:[%s7 + $0x70] sm:$0xf]
    %v761 = vld [vmem:[%s7 + $0x74] sm:$0xf]
    %v762 = vld [vmem:[%s7 + $0x78] sm:$0xf]
    %v763 = vld [vmem:[%s7 + $0x7c] sm:$0xf]
    %v764 = vld [vmem:[%s8] sm:$0xf]
    %v765 = vld [vmem:[%s8 + $0x4] sm:$0xf]
    %v766 = vld [vmem:[%s8 + $0x8] sm:$0xf]
    %v767 = vld [vmem:[%s8 + $0xc] sm:$0xf]
    %v768 = vld [vmem:[%s8 + $0x10] sm:$0xf]
    %v769 = vld [vmem:[%s8 + $0x14] sm:$0xf]
    %v770 = vld [vmem:[%s8 + $0x18] sm:$0xf]
    %v771 = vld [vmem:[%s8 + $0x1c] sm:$0xf]
    %v772 = vld [vmem:[%s8 + $0x20] sm:$0xf]
    %v773 = vld [vmem:[%s8 + $0x24] sm:$0xf]
    %v774 = vld [vmem:[%s8 + $0x28] sm:$0xf]
    %v775 = vld [vmem:[%s8 + $0x2c] sm:$0xf]
    %v776 = vld [vmem:[%s8 + $0x30] sm:$0xf]
    %v777 = vld [vmem:[%s8 + $0x34] sm:$0xf]
    %v778 = vld [vmem:[%s8 + $0x38] sm:$0xf]
    %v779 = vld [vmem:[%s8 + $0x3c] sm:$0xf]
    %v780 = vld [vmem:[%s8 + $0x40] sm:$0xf]
    %v781 = vld [vmem:[%s8 + $0x44] sm:$0xf]
    %v782 = vld [vmem:[%s8 + $0x48] sm:$0xf]
    %v783 = vld [vmem:[%s8 + $0x4c] sm:$0xf]
    %v784 = vld [vmem:[%s8 + $0x50] sm:$0xf]
    %v785 = vld [vmem:[%s8 + $0x54] sm:$0xf]
    %v786 = vld [vmem:[%s8 + $0x58] sm:$0xf]
    %v787 = vld [vmem:[%s8 + $0x5c] sm:$0xf]
    %v788 = vld [vmem:[%s8 + $0x60] sm:$0xf]
    %v789 = vld [vmem:[%s8 + $0x64] sm:$0xf]
    %v790 = vld [vmem:[%s8 + $0x68] sm:$0xf]
    %v791 = vld [vmem:[%s8 + $0x6c] sm:$0xf]
    %v792 = vld [vmem:[%s8 + $0x70] sm:$0xf]
    %v793 = vld [vmem:[%s8 + $0x74] sm:$0xf]
    %v794 = vld [vmem:[%s8 + $0x78] sm:$0xf]
    %v795 = vld [vmem:[%s8 + $0x7c] sm:$0xf]
    %v828 = vunpack.c.l.b16 %v764
    %v829 = vunpack.c.l.b16 %v765
    %v830 = vunpack.c.l.b16 %v766
    %v831 = vunpack.c.l.b16 %v767
    %v832 = vunpack.c.l.b16 %v768
    %v833 = vunpack.c.l.b16 %v769
    %v834 = vunpack.c.l.b16 %v770
    %v835 = vunpack.c.l.b16 %v771
    %v836 = vunpack.c.l.b16 %v772
    %v837 = vunpack.c.l.b16 %v773
    %v838 = vunpack.c.l.b16 %v774
    %v839 = vunpack.c.l.b16 %v775
    %v840 = vunpack.c.l.b16 %v776
    %v841 = vunpack.c.l.b16 %v777
    %v842 = vunpack.c.l.b16 %v778
    %v843 = vunpack.c.l.b16 %v779
    %v844 = vunpack.c.l.b16 %v780
    %v845 = vunpack.c.l.b16 %v781
    %v846 = vunpack.c.l.b16 %v782
    %v847 = vunpack.c.l.b16 %v783
    %v848 = vunpack.c.l.b16 %v784
    %v849 = vunpack.c.l.b16 %v785
    %v850 = vunpack.c.l.b16 %v786
    %v851 = vunpack.c.l.b16 %v787
    %v852 = vunpack.c.l.b16 %v788
    %v853 = vunpack.c.l.b16 %v789
    %v854 = vunpack.c.l.b16 %v790
    %v855 = vunpack.c.l.b16 %v791
    %v856 = vunpack.c.l.b16 %v792
    %v857 = vunpack.c.l.b16 %v793
    %v858 = vunpack.c.l.b16 %v794
    %v859 = vunpack.c.l.b16 %v795
    %v860 = vpack.c.b16 %v829, %v828
    %v861 = vpack.c.b16 %v831, %v830
    %v862 = vpack.c.b16 %v833, %v832
    %v863 = vpack.c.b16 %v835, %v834
    %v864 = vpack.c.b16 %v837, %v836
    %v865 = vpack.c.b16 %v839, %v838
    %v866 = vpack.c.b16 %v841, %v840
    %v867 = vpack.c.b16 %v843, %v842
    %v868 = vpack.c.b16 %v845, %v844
    %v869 = vpack.c.b16 %v847, %v846
    %v870 = vpack.c.b16 %v849, %v848
    %v871 = vpack.c.b16 %v851, %v850
    %v872 = vpack.c.b16 %v853, %v852
    %v873 = vpack.c.b16 %v855, %v854
    %v874 = vpack.c.b16 %v857, %v856
    %v875 = vpack.c.b16 %v859, %v858
    %892 = vmatprep.subr.bf16.mxu0 0
    %893 = vmatpush1.bf16.msra.mxu0 %v860
    %894 = vmatprep.subr.bf16.mxu0 0
    %895 = vmatpush1.bf16.msra.mxu0 %v861
    %896 = vmatprep.subr.bf16.mxu0 0
    %897 = vmatpush1.bf16.msra.mxu0 %v862
    %898 = vmatprep.subr.bf16.mxu0 0
    %899 = vmatpush1.bf16.msra.mxu0 %v863
    %900 = vmatprep.subr.bf16.mxu0 0
    %901 = vmatpush1.bf16.msra.mxu0 %v864
    %902 = vmatprep.subr.bf16.mxu0 0
    %903 = vmatpush1.bf16.msra.mxu0 %v865
    %904 = vmatprep.subr.bf16.mxu0 0
    %905 = vmatpush1.bf16.msra.mxu0 %v866
    %906 = vmatprep.subr.bf16.mxu0 0
    %907 = vmatpush1.bf16.msra.mxu0 %v867
    %908 = vmatprep.subr.bf16.mxu0 0
    %909 = vmatpush1.bf16.msra.mxu0 %v868
    %910 = vmatprep.subr.bf16.mxu0 0
    %911 = vmatpush1.bf16.msra.mxu0 %v869
    %912 = vmatprep.subr.bf16.mxu0 0
    %913 = vmatpush1.bf16.msra.mxu0 %v870
    %914 = vmatprep.subr.bf16.mxu0 0
    %915 = vmatpush1.bf16.msra.mxu0 %v871
    %916 = vmatprep.subr.bf16.mxu0 0
    %917 = vmatpush1.bf16.msra.mxu0 %v872
    %918 = vmatprep.subr.bf16.mxu0 0
    %919 = vmatpush1.bf16.msra.mxu0 %v873
    %920 = vmatprep.subr.bf16.mxu0 0
    %921 = vmatpush1.bf16.msra.mxu0 %v874
    %922 = vmatprep.subr.bf16.mxu0 0
    %923 = vmatpush1.bf16.msra.mxu0 %v875
    %924 = vmatprep.mubr.bf16.mxu0 %v731
    %925 = vmatmul.mubr.bf16.gmra.mrb[0].mxu0 %v730
    %v926 = vpop.f32.mrb[0].mxu0
    %v927 = vadd.f32 0.0, %v926
    %v928 = vpop.f32.mrb[0].mxu0
    %v929 = vpop.f32.mrb[0].mxu0
    %v930 = vpop.f32.mrb[0].mxu0
    %931 = vdwg.mxu0
    %v964 = vunpack.c.l.b16 %v732
    %v965 = vunpack.c.l.b16 %v733
    %v966 = vunpack.c.l.b16 %v734
    %v967 = vunpack.c.l.b16 %v735
    %v968 = vunpack.c.l.b16 %v736
    %v969 = vunpack.c.l.b16 %v737
    %v970 = vunpack.c.l.b16 %v738
    %v971 = vunpack.c.l.b16 %v739
    %v972 = vunpack.c.l.b16 %v740
    %v973 = vunpack.c.l.b16 %v741
    %v974 = vunpack.c.l.b16 %v742
    %v975 = vunpack.c.l.b16 %v743
    %v976 = vunpack.c.l.b16 %v744
    %v977 = vunpack.c.l.b16 %v745
    %v978 = vunpack.c.l.b16 %v746
    %v979 = vunpack.c.l.b16 %v747
    %v980 = vunpack.c.l.b16 %v748
    %v981 = vunpack.c.l.b16 %v749
    %v982 = vunpack.c.l.b16 %v750
    %v983 = vunpack.c.l.b16 %v751
    %v984 = vunpack.c.l.b16 %v752
    %v985 = vunpack.c.l.b16 %v753
    %v986 = vunpack.c.l.b16 %v754
    %v987 = vunpack.c.l.b16 %v755
    %v988 = vunpack.c.l.b16 %v756
    %v989 = vunpack.c.l.b16 %v757
    %v990 = vunpack.c.l.b16 %v758
    %v991 = vunpack.c.l.b16 %v759
    %v992 = vunpack.c.l.b16 %v760
    %v993 = vunpack.c.l.b16 %v761
    %v994 = vunpack.c.l.b16 %v762
    %v995 = vunpack.c.l.b16 %v763
    %v996 = vpack.c.b16 %v965, %v964
    %v997 = vpack.c.b16 %v967, %v966
    %v998 = vpack.c.b16 %v969, %v968
    %v999 = vpack.c.b16 %v971, %v970
    %v1000 = vpack.c.b16 %v973, %v972
    %v1001 = vpack.c.b16 %v975, %v974
    %v1002 = vpack.c.b16 %v977, %v976
    %v1003 = vpack.c.b16 %v979, %v978
    %v1004 = vpack.c.b16 %v981, %v980
    %v1005 = vpack.c.b16 %v983, %v982
    %v1006 = vpack.c.b16 %v985, %v984
    %v1007 = vpack.c.b16 %v987, %v986
    %v1008 = vpack.c.b16 %v989, %v988
    %v1009 = vpack.c.b16 %v991, %v990
    %v1010 = vpack.c.b16 %v993, %v992
    %v1011 = vpack.c.b16 %v995, %v994
    %1028 = vmatprep.subr.bf16.mxu0 0
    %1029 = vmatpush1.bf16.msra.mxu0 %v996
    %1030 = vmatprep.subr.bf16.mxu0 0
    %1031 = vmatpush1.bf16.msra.mxu0 %v997
    %1032 = vmatprep.subr.bf16.mxu0 0
    %1033 = vmatpush1.bf16.msra.mxu0 %v998
    %1034 = vmatprep.subr.bf16.mxu0 0
    %1035 = vmatpush1.bf16.msra.mxu0 %v999
    %1036 = vmatprep.subr.bf16.mxu0 0
    %1037 = vmatpush1.bf16.msra.mxu0 %v1000
    %1038 = vmatprep.subr.bf16.mxu0 0
    %1039 = vmatpush1.bf16.msra.mxu0 %v1001
    %1040 = vmatprep.subr.bf16.mxu0 0
    %1041 = vmatpush1.bf16.msra.mxu0 %v1002
    %1042 = vmatprep.subr.bf16.mxu0 0
    %1043 = vmatpush1.bf16.msra.mxu0 %v1003
    %1044 = vmatprep.subr.bf16.mxu0 0
    %1045 = vmatpush1.bf16.msra.mxu0 %v1004
    %1046 = vmatprep.subr.bf16.mxu0 0
    %1047 = vmatpush1.bf16.msra.mxu0 %v1005
    %1048 = vmatprep.subr.bf16.mxu0 0
    %1049 = vmatpush1.bf16.msra.mxu0 %v1006
    %1050 = vmatprep.subr.bf16.mxu0 0
    %1051 = vmatpush1.bf16.msra.mxu0 %v1007
    %1052 = vmatprep.subr.bf16.mxu0 0
    %1053 = vmatpush1.bf16.msra.mxu0 %v1008
    %1054 = vmatprep.subr.bf16.mxu0 0
    %1055 = vmatpush1.bf16.msra.mxu0 %v1009
    %1056 = vmatprep.subr.bf16.mxu0 0
    %1057 = vmatpush1.bf16.msra.mxu0 %v1010
    %1058 = vmatprep.subr.bf16.mxu0 0
    %1059 = vmatpush1.bf16.msra.mxu0 %v1011
    %1060 = vmatprep.mubr.bf16.mxu0 %v482
    %1061 = vmatmul.mubr.bf16.gmra.mrb[0].mxu0 %v481
    %v1062 = vpop.f32.mrb[0].mxu0
    %v1063 = vadd.f32 %v927, %v1062
    %v1064 = vpop.f32.mrb[0].mxu0
    %v1065 = vpop.f32.mrb[0].mxu0
    %v1066 = vpop.f32.mrb[0].mxu0
    %1067 = vdwg.mxu0
    %v1068 = vld [vmem:[%s9] sm:$0x1]
    %v1070 = vlaneseq
    %v1071 = vshrl.u32 %v1070, 7
    %v1072 = vsub.s32 0, %v1071
    %v1073 = vrot.slane %v1068, %v1072
    %v1075 = vadd.f32 %v1063, %v1073
    %vm1076 = vcmask 15360
    %1077 = vst.msk [vmem:[%s10] sm:$0xff] %vm1076, %v1075
    // Predicated region
    $region50: #{tpu_custom_call.1} parent=1 // pred_check
      _
    $region51: #{tpu_custom_call.1} parent=1 // pred_check_branch
      %1079 = sbr.rel (0) target = $region53
    $region52: #{tpu_custom_call.1} parent=1 // pred_region
      _
    $region53: #{tpu_custom_call.1} parent=1 // pred_fallthru
      _
    // Predicated region
    $region54: #{tpu_custom_call.1} parent=1 // pred_check
      _
    $region55: #{tpu_custom_call.1} parent=1 // pred_check_branch
      %1081 = sbr.rel (0) target = $region57
    $region56: #{tpu_custom_call.1} parent=1 // pred_region
      _
    $region57: #{tpu_custom_call.1} parent=1 // pred_fallthru
      _
    %1082 = vsyncpa [#allocation3], 1
    %1083 = vsyncpa [#allocation5], 1

</llo_original>
